<compile_context>
chip_gen: v7x
topology: tpu7x:2x2x1
jax: 0.10.0
libtpu: 0.0.40
codegen_flags: <defaults>
</compile_context>

<pallas_src>
import functools

import jax
import jax.numpy as jnp
from jax.experimental import pallas as pl
from jax.experimental.pallas import tpu as pltpu


def _round_up(v, m):
    return ((v + m - 1) // m) * m


def _prenet_fused_kernel(x_ref, *refs, num_layers, keep2, inv_keep2):
    """All pre-net blocks, fused, for one tile of rows.

    refs layout: for each layer l -> (w_ref, b_ref[, u_ref]); last ref = o_ref.
    """
    o_ref = refs[-1]
    per_layer = 3 if keep2 is not None else 2

    h = x_ref[...]
    for l in range(num_layers):
        base = per_layer * l
        w_ref = refs[base]
        b_ref = refs[base + 1]

        # Linear on the MXU: bf16 operands, f32 accumulation.
        h = jnp.dot(
            h.astype(jnp.bfloat16),
            w_ref[...].astype(jnp.bfloat16),
            preferred_element_type=jnp.float32,
        )
        h = h + b_ref[...]          # bias added once per layer per tile
        h = jnp.maximum(h, 0.0)     # ReLU

        if keep2 is not None:
            # Fused double dropout: keep with prob keep^2, scale by 1/keep^2.
            u = refs[base + 2][...]
            h = jnp.where(
                u < jnp.float32(keep2),
                h * jnp.float32(inv_keep2),
                jnp.float32(0.0),
            )

    o_ref[...] = h.astype(o_ref.dtype)


def prenet_forward(x, params, *, dropout_p=0.5, rng_key=None, tile_rows=256):
    """x: (B, T, in_dim) -> (B, T, hidden_dim). Dropout is always active."""
    if not (0.0 <= dropout_p < 1.0):
        raise ValueError("dropout_p must be in [0, 1)")
    if rng_key is None:
        rng_key = jax.random.PRNGKey(1234)

    B, T, D = x.shape
    N = B * T
    H = params[0][0].shape[1]
    num_layers = len(params)

    use_dropout = dropout_p > 0.0
    keep = 1.0 - dropout_p
    keep2 = keep * keep if use_dropout else None
    inv_keep2 = (1.0 / (keep * keep)) if use_dropout else 1.0

    # Lane-align feature dims to 128; tile the row dimension.
    d_pad = _round_up(D, 128)
    h_pad = _round_up(H, 128)
    tm = min(tile_rows, _round_up(N, 8))
    n_pad = _round_up(N, tm)

    x2 = x.reshape(N, D)
    x2 = jnp.pad(x2, ((0, n_pad - N), (0, d_pad - D)))

    in_specs = [pl.BlockSpec((tm, d_pad), lambda i: (i, 0))]
    args = [x2]
    for li, (w, b) in enumerate(params):
        d_in = w.shape[0]
        d_in_pad = d_pad if li == 0 else h_pad
        w_p = jnp.pad(w, ((0, d_in_pad - d_in), (0, h_pad - H)))
        b_p = jnp.pad(b.reshape(1, H), ((0, 0), (0, h_pad - H)))
        in_specs += [
            pl.BlockSpec((d_in_pad, h_pad), lambda i: (0, 0)),  # W: resident
            pl.BlockSpec((1, h_pad), lambda i: (0, 0)),         # b: resident
        ]
        args += [w_p, b_p]
        if use_dropout:
            rng_key, sub = jax.random.split(rng_key)
            u = jax.random.uniform(sub, (n_pad, h_pad), dtype=jnp.float32)
            in_specs.append(pl.BlockSpec((tm, h_pad), lambda i: (i, 0)))
            args.append(u)

    kernel = functools.partial(
        _prenet_fused_kernel,
        num_layers=num_layers,
        keep2=keep2,
        inv_keep2=inv_keep2,
    )

    out = pl.pallas_call(
        kernel,
        out_shape=jax.ShapeDtypeStruct((n_pad, h_pad), jnp.float32),
        grid=(n_pad // tm,),
        in_specs=in_specs,
        out_specs=pl.BlockSpec((tm, h_pad), lambda i: (i, 0)),
        compiler_params=pltpu.CompilerParams(
            dimension_semantics=("parallel",),
            vmem_limit_bytes=32 * 1024 * 1024,
        ),
    )(*args)

    return out[:N, :H].reshape(B, T, H)


def init_prenet_params(key, in_dim, hidden_dim, layers):
    """Deterministic synthetic parameters matching nn.Linear shapes."""
    params = []
    d_in = in_dim
    for _ in range(layers):
        key, kw, kb = jax.random.split(key, 3)
        bound = 1.0 / jnp.sqrt(d_in)
        # stored as (in, out); torch stores (out, in) -> this is W_torch.T
        w = jax.random.uniform(kw, (d_in, hidden_dim), jnp.float32, -bound, bound)
        b = jax.random.uniform(kb, (1, hidden_dim), jnp.float32, -bound, bound)
        params.append((w, b))
        d_in = hidden_dim
    return params


if __name__ == "__main__":
    key = jax.random.PRNGKey(0)
    kx, kp, kd = jax.random.split(key, 3)

    B, T, IN_DIM, HIDDEN, LAYERS, DROPOUT = 2, 8, 16, 32, 2, 0.5

    x = jax.random.normal(kx, (B, T, IN_DIM), dtype=jnp.float32)
    params = init_prenet_params(kp, IN_DIM, HIDDEN, LAYERS)

    out = prenet_forward(x, params, dropout_p=DROPOUT, rng_key=kd)
    out = jax.block_until_ready(out)

    assert out.shape == (B, T, HIDDEN), out.shape
    assert out.dtype == jnp.float32
    assert bool(jnp.isfinite(out).all())

    print("KERNEL_OK")
</pallas_src>

<mosaic_0001>
module attributes {stable_mosaic.version = 11 : i64} {
  func.func @_prenet_fused_kernel(%arg0: i32, %arg1: memref<16x128xf32, #tpu.memory_space<vmem>>, %arg2: memref<128x128xf32, #tpu.memory_space<vmem>>, %arg3: memref<1x128xf32, #tpu.memory_space<vmem>>, %arg4: memref<16x128xf32, #tpu.memory_space<vmem>>, %arg5: memref<128x128xf32, #tpu.memory_space<vmem>>, %arg6: memref<1x128xf32, #tpu.memory_space<vmem>>, %arg7: memref<16x128xf32, #tpu.memory_space<vmem>>, %arg8: memref<16x128xf32, #tpu.memory_space<vmem>>) attributes {dimension_semantics = [#tpu.dimension_semantics<parallel>], iteration_bounds = array<i64: 1>, scalar_prefetch = 0 : i64, scratch_operands = 0 : i64, tpu.core_type = #tpu.core_type<tc>, window_params = [{transform_indices = @transform_0, window_bounds = array<i64: 16, 128>}, {pipeline_mode = #tpu.pipeline_mode<synchronous>, transform_indices = @transform_1, window_bounds = array<i64: 128, 128>}, {pipeline_mode = #tpu.pipeline_mode<synchronous>, transform_indices = @transform_2, window_bounds = array<i64: 1, 128>}, {transform_indices = @transform_3, window_bounds = array<i64: 16, 128>}, {pipeline_mode = #tpu.pipeline_mode<synchronous>, transform_indices = @transform_4, window_bounds = array<i64: 128, 128>}, {pipeline_mode = #tpu.pipeline_mode<synchronous>, transform_indices = @transform_5, window_bounds = array<i64: 1, 128>}, {transform_indices = @transform_6, window_bounds = array<i64: 16, 128>}, {transform_indices = @transform_7, window_bounds = array<i64: 16, 128>}]} {
    %c0 = arith.constant 0 : index
    %c0_0 = arith.constant 0 : index
    %0 = vector.load %arg1[%c0, %c0_0] : memref<16x128xf32, #tpu.memory_space<vmem>>, vector<16x128xf32>
    %1 = arith.truncf %0 : vector<16x128xf32> to vector<16x128xbf16>
    %c0_1 = arith.constant 0 : index
    %c0_2 = arith.constant 0 : index
    %2 = vector.load %arg2[%c0_1, %c0_2] : memref<128x128xf32, #tpu.memory_space<vmem>>, vector<128x128xf32>
    %3 = arith.truncf %2 : vector<128x128xf32> to vector<128x128xbf16>
    %cst = arith.constant dense<0.000000e+00> : vector<16x128xf32>
    %4 = tpu.matmul %1, %3, %cst {dimension_numbers = #tpu.dot_dimension_numbers<[1], [0], [0], [1], [0, 0, 1, 1], [], []>} : vector<16x128xbf16>, vector<128x128xbf16>, vector<16x128xf32> -> vector<16x128xf32>
    %c0_3 = arith.constant 0 : index
    %c0_4 = arith.constant 0 : index
    %5 = vector.load %arg3[%c0_3, %c0_4] : memref<1x128xf32, #tpu.memory_space<vmem>>, vector<1x128xf32>
    %6 = vector.broadcast %5 : vector<1x128xf32> to vector<16x128xf32>
    %7 = arith.addf %4, %6 : vector<16x128xf32>
    %cst_5 = arith.constant 0.000000e+00 : f32
    %8 = vector.broadcast %cst_5 : f32 to vector<16x128xf32>
    %9 = arith.maximumf %7, %8 : vector<16x128xf32>
    %c0_6 = arith.constant 0 : index
    %c0_7 = arith.constant 0 : index
    %10 = vector.load %arg4[%c0_6, %c0_7] : memref<16x128xf32, #tpu.memory_space<vmem>>, vector<16x128xf32>
    %cst_8 = arith.constant 2.500000e-01 : f32
    %11 = vector.broadcast %cst_8 : f32 to vector<16x128xf32>
    %12 = arith.cmpf olt, %10, %11 : vector<16x128xf32>
    %cst_9 = arith.constant 4.000000e+00 : f32
    %13 = vector.broadcast %cst_9 : f32 to vector<16x128xf32>
    %14 = arith.mulf %9, %13 : vector<16x128xf32>
    %cst_10 = arith.constant 0.000000e+00 : f32
    %15 = vector.broadcast %cst_10 : f32 to vector<16x128xf32>
    %16 = arith.select %12, %14, %15 : vector<16x128xi1>, vector<16x128xf32>
    %17 = arith.truncf %16 : vector<16x128xf32> to vector<16x128xbf16>
    %c0_11 = arith.constant 0 : index
    %c0_12 = arith.constant 0 : index
    %18 = vector.load %arg5[%c0_11, %c0_12] : memref<128x128xf32, #tpu.memory_space<vmem>>, vector<128x128xf32>
    %19 = arith.truncf %18 : vector<128x128xf32> to vector<128x128xbf16>
    %cst_13 = arith.constant dense<0.000000e+00> : vector<16x128xf32>
    %20 = tpu.matmul %17, %19, %cst_13 {dimension_numbers = #tpu.dot_dimension_numbers<[1], [0], [0], [1], [0, 0, 1, 1], [], []>} : vector<16x128xbf16>, vector<128x128xbf16>, vector<16x128xf32> -> vector<16x128xf32>
    %c0_14 = arith.constant 0 : index
    %c0_15 = arith.constant 0 : index
    %21 = vector.load %arg6[%c0_14, %c0_15] : memref<1x128xf32, #tpu.memory_space<vmem>>, vector<1x128xf32>
    %22 = vector.broadcast %21 : vector<1x128xf32> to vector<16x128xf32>
    %23 = arith.addf %20, %22 : vector<16x128xf32>
    %cst_16 = arith.constant 0.000000e+00 : f32
    %24 = vector.broadcast %cst_16 : f32 to vector<16x128xf32>
    %25 = arith.maximumf %23, %24 : vector<16x128xf32>
    %c0_17 = arith.constant 0 : index
    %c0_18 = arith.constant 0 : index
    %26 = vector.load %arg7[%c0_17, %c0_18] : memref<16x128xf32, #tpu.memory_space<vmem>>, vector<16x128xf32>
    %cst_19 = arith.constant 2.500000e-01 : f32
    %27 = vector.broadcast %cst_19 : f32 to vector<16x128xf32>
    %28 = arith.cmpf olt, %26, %27 : vector<16x128xf32>
    %cst_20 = arith.constant 4.000000e+00 : f32
    %29 = vector.broadcast %cst_20 : f32 to vector<16x128xf32>
    %30 = arith.mulf %25, %29 : vector<16x128xf32>
    %cst_21 = arith.constant 0.000000e+00 : f32
    %31 = vector.broadcast %cst_21 : f32 to vector<16x128xf32>
    %32 = arith.select %28, %30, %31 : vector<16x128xi1>, vector<16x128xf32>
    %c0_22 = arith.constant 0 : index
    %c0_23 = arith.constant 0 : index
    %33 = vector.load %arg8[%c0_22, %c0_23] : memref<16x128xf32, #tpu.memory_space<vmem>>, vector<16x128xf32>
    tpu.vector_store %arg8[%c0_22, %c0_23], %32 {strides = array<i32>} : memref<16x128xf32, #tpu.memory_space<vmem>>, vector<16x128xf32>,
    return
  }
  func.func @transform_0(%arg0: i32) -> (i32, i32) {
    %c0_i32 = arith.constant 0 : i32
    %c0_i32_0 = arith.constant 0 : i32
    return %arg0, %c0_i32 : i32, i32
  }
  func.func @transform_1(%arg0: i32) -> (i32, i32) {
    %c0_i32 = arith.constant 0 : i32
    %c0_i32_0 = arith.constant 0 : i32
    %c0_i32_1 = arith.constant 0 : i32
    return %c0_i32, %c0_i32_0 : i32, i32
  }
  func.func @transform_2(%arg0: i32) -> (i32, i32) {
    %c0_i32 = arith.constant 0 : i32
    %c0_i32_0 = arith.constant 0 : i32
    %c0_i32_1 = arith.constant 0 : i32
    return %c0_i32, %c0_i32_0 : i32, i32
  }
  func.func @transform_3(%arg0: i32) -> (i32, i32) {
    %c0_i32 = arith.constant 0 : i32
    %c0_i32_0 = arith.constant 0 : i32
    return %arg0, %c0_i32 : i32, i32
  }
  func.func @transform_4(%arg0: i32) -> (i32, i32) {
    %c0_i32 = arith.constant 0 : i32
    %c0_i32_0 = arith.constant 0 : i32
    %c0_i32_1 = arith.constant 0 : i32
    return %c0_i32, %c0_i32_0 : i32, i32
  }
  func.func @transform_5(%arg0: i32) -> (i32, i32) {
    %c0_i32 = arith.constant 0 : i32
    %c0_i32_0 = arith.constant 0 : i32
    %c0_i32_1 = arith.constant 0 : i32
    return %c0_i32, %c0_i32_0 : i32, i32
  }
  func.func @transform_6(%arg0: i32) -> (i32, i32) {
    %c0_i32 = arith.constant 0 : i32
    %c0_i32_0 = arith.constant 0 : i32
    return %arg0, %c0_i32 : i32, i32
  }
  func.func @transform_7(%arg0: i32) -> (i32, i32) {
    %c0_i32 = arith.constant 0 : i32
    %c0_i32_0 = arith.constant 0 : i32
    return %arg0, %c0_i32 : i32, i32
  }
}

</mosaic_0001>

<llo_original>
// kernel: tpu_custom_call.1
$region0: #{tpu_custom_call.1}
  #allocation0 [shape = 'u32[]', space=smem, size = 0x4, offset = 0x4, fixed_abs, tag = 'smem constant byte address 0x4 - core index']
  #allocation1 [shape = 'u32[144,128]{1,0:T(1,128)}', space=vmem, size = 0x12000, scoped, tag = 'internal scratch']
  %s0 = inlined_call_operand.hbm [shape: f32[16,128], index: 0, kind: input, shape index: {}]
  %s1 = inlined_call_operand.hbm [shape: f32[128,128], index: 1, kind: input, shape index: {}]
  %s2 = inlined_call_operand.vmem [shape: f32[1,128], index: 2, kind: input, shape index: {}]
  %s3 = inlined_call_operand.hbm [shape: f32[16,128], index: 3, kind: input, shape index: {}]
  %s4 = inlined_call_operand.hbm [shape: f32[128,128], index: 4, kind: input, shape index: {}]
  %s5 = inlined_call_operand.vmem [shape: f32[1,128], index: 5, kind: input, shape index: {}]
  %s6 = inlined_call_operand.vmem [shape: f32[16,128], index: 6, kind: input, shape index: {}]
  %s7 = inlined_call_operand.hbm [shape: f32[16,128], index: 7, kind: output, shape index: {}]
  %s8 = sld [smem:[#allocation0]]
  $region54: #{tpu_custom_call.1} parent=0
    _
  %s10 = ssub.s32 1, %s8
  %s11 = scalar_select 0, %s10, %s8
  $region1: #{tpu_custom_call.1} parent=0
    #allocation2 [shape = 'u8[8192]{0}', space=vmem, size = 0x2000, scoped, tag = 'input window, operand 0, single buffered']
    #allocation3 [shape = 's32[1]{0}', space=sflag, size = 0x4, scoped, tag = 'scoped memory for tpu_custom_call.1']
    #allocation4 [shape = 's32[1]{0}', space=sflag, size = 0x4, scoped, tag = 'scoped memory for tpu_custom_call.1']
    #allocation5 [shape = 'u8[65536]{0}', space=vmem, size = 0x10000, scoped, tag = 'input window, operand 1, single buffered']
    #allocation6 [shape = 's32[1]{0}', space=sflag, size = 0x4, scoped, tag = 'scoped memory for tpu_custom_call.1']
    #allocation7 [shape = 'u8[8192]{0}', space=vmem, size = 0x2000, scoped, tag = 'input window, operand 3, single buffered']
    #allocation8 [shape = 'u8[65536]{0}', space=vmem, size = 0x10000, scoped, tag = 'input window, operand 4, single buffered']
    #allocation9 [shape = 's32[1]{0}', space=sflag, size = 0x4, scoped, tag = 'scoped memory for tpu_custom_call.1']
    #allocation10 [shape = 'u8[8192]{0}', space=vmem, size = 0x2000, scoped, tag = 'output window, operand 0, single buffered']
    %12 = vsyncpa [#allocation3], 0
    %13 = vsyncpa [#allocation6], 0
    %14 = vsyncpa [#allocation9], 0
    %15 = vsyncpa [#allocation4], 0
    // Predicated region
    $region2: #{tpu_custom_call.1} parent=1 // pred_check
      _
    $region3: #{tpu_custom_call.1} parent=1 // pred_check_branch
      %17 = sbr.rel (0) target = $region5
    $region4: #{tpu_custom_call.1} parent=1 // pred_region
      %s19 = ssub.s32 256, 256
      %20 = vsyncadd [#allocation3], %s19
      %s21 = sshll.u32 [#allocation2], 4
      %s22 = int_to_ptr.vmem [resolvable:$true] %s21
      %27 = dma.hbm_to_vmem [thread:$0]  %s0, 256, %s22, [#allocation3], 128, 128, 8
    $region5: #{tpu_custom_call.1} parent=1 // pred_fallthru
      _
    // Predicated region
    $region6: #{tpu_custom_call.1} parent=1 // pred_check
      _
    $region7: #{tpu_custom_call.1} parent=1 // pred_check_branch
      %29 = sbr.rel (0) target = $region9
    $region8: #{tpu_custom_call.1} parent=1 // pred_region
      %s31 = ssub.s32 2048, 2048
      %32 = vsyncadd [#allocation6], %s31
      %s33 = sshll.u32 [#allocation5], 4
      %s34 = int_to_ptr.vmem [resolvable:$true] %s33
      %39 = dma.hbm_to_vmem [thread:$0]  %s1, 2048, %s34, [#allocation6], 128, 128, 8
    $region9: #{tpu_custom_call.1} parent=1 // pred_fallthru
      _
    // Predicated region
    $region10: #{tpu_custom_call.1} parent=1 // pred_check
      _
    $region11: #{tpu_custom_call.1} parent=1 // pred_check_branch
      %41 = sbr.rel (0) target = $region13
    $region12: #{tpu_custom_call.1} parent=1 // pred_region
      _
    $region13: #{tpu_custom_call.1} parent=1 // pred_fallthru
      _
    // Predicated region
    $region14: #{tpu_custom_call.1} parent=1 // pred_check
      _
    $region15: #{tpu_custom_call.1} parent=1 // pred_check_branch
      %43 = sbr.rel (0) target = $region17
    $region16: #{tpu_custom_call.1} parent=1 // pred_region
      %s45 = ssub.s32 256, 256
      %46 = vsyncadd [#allocation6], %s45
      %s47 = sshll.u32 [#allocation7], 4
      %s48 = int_to_ptr.vmem [resolvable:$true] %s47
      %53 = dma.hbm_to_vmem [thread:$0]  %s3, 256, %s48, [#allocation6], 128, 128, 8
    $region17: #{tpu_custom_call.1} parent=1 // pred_fallthru
      _
    // Predicated region
    $region18: #{tpu_custom_call.1} parent=1 // pred_check
      _
    $region19: #{tpu_custom_call.1} parent=1 // pred_check_branch
      %55 = sbr.rel (0) target = $region21
    $region20: #{tpu_custom_call.1} parent=1 // pred_region
      %s57 = ssub.s32 2048, 2048
      %58 = vsyncadd [#allocation9], %s57
      %s59 = sshll.u32 [#allocation8], 4
      %s60 = int_to_ptr.vmem [resolvable:$true] %s59
      %65 = dma.hbm_to_vmem [thread:$0]  %s4, 2048, %s60, [#allocation9], 128, 128, 8
    $region21: #{tpu_custom_call.1} parent=1 // pred_fallthru
      _
    // Predicated region
    $region22: #{tpu_custom_call.1} parent=1 // pred_check
      _
    $region23: #{tpu_custom_call.1} parent=1 // pred_check_branch
      %67 = sbr.rel (0) target = $region25
    $region24: #{tpu_custom_call.1} parent=1 // pred_region
      _
    $region25: #{tpu_custom_call.1} parent=1 // pred_fallthru
      _
    // Predicated region
    $region26: #{tpu_custom_call.1} parent=1 // pred_check
      _
    $region27: #{tpu_custom_call.1} parent=1 // pred_check_branch
      %69 = sbr.rel (0) target = $region29
    $region28: #{tpu_custom_call.1} parent=1 // pred_region
      _
    $region29: #{tpu_custom_call.1} parent=1 // pred_fallthru
      _
    // Predicated region
    $region30: #{tpu_custom_call.1} parent=1 // pred_check
      _
    $region31: #{tpu_custom_call.1} parent=1 // pred_check_branch
      %71 = sbr.rel (0) target = $region33
    $region32: #{tpu_custom_call.1} parent=1 // pred_region
      %72 = dma.done [#allocation3], 256
    $region33: #{tpu_custom_call.1} parent=1 // pred_fallthru
      _
    // Predicated region
    $region34: #{tpu_custom_call.1} parent=1 // pred_check
      _
    $region35: #{tpu_custom_call.1} parent=1 // pred_check_branch
      %74 = sbr.rel (0) target = $region37
    $region36: #{tpu_custom_call.1} parent=1 // pred_region
      %75 = dma.done [#allocation6], 2048
    $region37: #{tpu_custom_call.1} parent=1 // pred_fallthru
      _
    // Predicated region
    $region38: #{tpu_custom_call.1} parent=1 // pred_check
      _
    $region39: #{tpu_custom_call.1} parent=1 // pred_check_branch
      %77 = sbr.rel (0) target = $region41
    $region40: #{tpu_custom_call.1} parent=1 // pred_region
      %78 = dma.done [#allocation6], 256
    $region41: #{tpu_custom_call.1} parent=1 // pred_fallthru
      _
    // Predicated region
    $region42: #{tpu_custom_call.1} parent=1 // pred_check
      _
    $region43: #{tpu_custom_call.1} parent=1 // pred_check_branch
      %80 = sbr.rel (0) target = $region45
    $region44: #{tpu_custom_call.1} parent=1 // pred_region
      %81 = dma.done [#allocation9], 2048
    $region45: #{tpu_custom_call.1} parent=1 // pred_fallthru
      _
    %v83 = vld [vmem:[#allocation2] sm:$0xff]
    %v84 = vld [vmem:[#allocation2 + $0x8] sm:$0xff]
    %v85 = vpack.c.bf16 %v84, %v83
    %v86 = vld [vmem:[#allocation5] sm:$0xff]
    %v87 = vld [vmem:[#allocation5 + $0x8] sm:$0xff]
    %v88 = vld [vmem:[#allocation5 + $0x10] sm:$0xff]
    %v89 = vld [vmem:[#allocation5 + $0x18] sm:$0xff]
    %v90 = vld [vmem:[#allocation5 + $0x20] sm:$0xff]
    %v91 = vld [vmem:[#allocation5 + $0x28] sm:$0xff]
    %v92 = vld [vmem:[#allocation5 + $0x30] sm:$0xff]
    %v93 = vld [vmem:[#allocation5 + $0x38] sm:$0xff]
    %v94 = vld [vmem:[#allocation5 + $0x40] sm:$0xff]
    %v95 = vld [vmem:[#allocation5 + $0x48] sm:$0xff]
    %v96 = vld [vmem:[#allocation5 + $0x50] sm:$0xff]
    %v97 = vld [vmem:[#allocation5 + $0x58] sm:$0xff]
    %v98 = vld [vmem:[#allocation5 + $0x60] sm:$0xff]
    %v99 = vld [vmem:[#allocation5 + $0x68] sm:$0xff]
    %v100 = vld [vmem:[#allocation5 + $0x70] sm:$0xff]
    %v101 = vld [vmem:[#allocation5 + $0x78] sm:$0xff]
    %v102 = vpack.c.bf16 %v87, %v86
    %v103 = vpack.c.bf16 %v89, %v88
    %v104 = vpack.c.bf16 %v91, %v90
    %v105 = vpack.c.bf16 %v93, %v92
    %v106 = vpack.c.bf16 %v95, %v94
    %v107 = vpack.c.bf16 %v97, %v96
    %v108 = vpack.c.bf16 %v99, %v98
    %v109 = vpack.c.bf16 %v101, %v100
    %v110 = vld [vmem:[%s2] sm:$0x1]
    %v112 = vlaneseq
    %v113 = vshrl.u32 %v112, 7
    %v114 = vsub.s32 0, %v113
    %v115 = vrot.slane %v110, %v114
    %117 = vmatprep.subr.bf16.mxu0 0
    %118 = vmatpush1.bf16.msra.mxu0 %v102
    %119 = vmatprep.subr.bf16.mxu0 0
    %120 = vmatpush1.bf16.msra.mxu0 %v103
    %121 = vmatprep.subr.bf16.mxu0 0
    %122 = vmatpush1.bf16.msra.mxu0 %v104
    %123 = vmatprep.subr.bf16.mxu0 0
    %124 = vmatpush1.bf16.msra.mxu0 %v105
    %125 = vmatprep.subr.bf16.mxu0 0
    %126 = vmatpush1.bf16.msra.mxu0 %v106
    %127 = vmatprep.subr.bf16.mxu0 0
    %128 = vmatpush1.bf16.msra.mxu0 %v107
    %129 = vmatprep.subr.bf16.mxu0 0
    %130 = vmatpush1.bf16.msra.mxu0 %v108
    %131 = vmatprep.subr.bf16.mxu0 0
    %132 = vmatpush1.bf16.msra.mxu0 %v109
    %133 = vmatprep.subr.bf16.mxu0 0
    %134 = vmatpush1.bf16.msra.mxu0 0
    %135 = vmatprep.subr.bf16.mxu0 0
    %136 = vmatpush1.bf16.msra.mxu0 0
    %137 = vmatprep.subr.bf16.mxu0 0
    %138 = vmatpush1.bf16.msra.mxu0 0
    %139 = vmatprep.subr.bf16.mxu0 0
    %140 = vmatpush1.bf16.msra.mxu0 0
    %141 = vmatprep.subr.bf16.mxu0 0
    %142 = vmatpush1.bf16.msra.mxu0 0
    %143 = vmatprep.subr.bf16.mxu0 0
    %144 = vmatpush1.bf16.msra.mxu0 0
    %145 = vmatprep.subr.bf16.mxu0 0
    %146 = vmatpush1.bf16.msra.mxu0 0
    %147 = vmatprep.subr.bf16.mxu0 0
    %148 = vmatpush1.bf16.msra.mxu0 0
    %149 = vmatprep.mubr.bf16.mxu0 0
    %150 = vmatmul.mubr.bf16.gmra.mrb[0].mxu0 %v85
    %v151 = vpop.f32.mrb[0].mxu0
    %v152 = vadd.f32 %v115, %v151
    %v153 = vpop.f32.mrb[0].mxu0
    %v154 = vpop.f32.mrb[0].mxu0
    %v155 = vadd.f32 %v115, %v154
    %v156 = vpop.f32.mrb[0].mxu0
    %157 = vdwg.mxu0
    %v158 = vmax.f32 %v152, 0.0
    %v159 = vmax.f32 %v155, 0.0
    %v160 = vld [vmem:[#allocation7] sm:$0xff]
    %v161 = vld [vmem:[#allocation7 + $0x8] sm:$0xff]
    %vm162 = vcmp.lt.f32.partialorder %v160, 0.25
    %vm163 = vcmp.lt.f32.partialorder %v161, 0.25
    %v164 = vmul.f32 %v158, 4.0
    %v165 = vmul.f32 %v159, 4.0
    %v166 = vsel %vm162, %v164, 0.0
    %v167 = vsel %vm163, %v165, 0.0
    %v168 = vpack.c.bf16 %v167, %v166
    %v169 = vld [vmem:[#allocation8] sm:$0xff]
    %v170 = vld [vmem:[#allocation8 + $0x8] sm:$0xff]
    %v171 = vld [vmem:[#allocation8 + $0x10] sm:$0xff]
    %v172 = vld [vmem:[#allocation8 + $0x18] sm:$0xff]
    %v173 = vld [vmem:[#allocation8 + $0x20] sm:$0xff]
    %v174 = vld [vmem:[#allocation8 + $0x28] sm:$0xff]
    %v175 = vld [vmem:[#allocation8 + $0x30] sm:$0xff]
    %v176 = vld [vmem:[#allocation8 + $0x38] sm:$0xff]
    %v177 = vld [vmem:[#allocation8 + $0x40] sm:$0xff]
    %v178 = vld [vmem:[#allocation8 + $0x48] sm:$0xff]
    %v179 = vld [vmem:[#allocation8 + $0x50] sm:$0xff]
    %v180 = vld [vmem:[#allocation8 + $0x58] sm:$0xff]
    %v181 = vld [vmem:[#allocation8 + $0x60] sm:$0xff]
    %v182 = vld [vmem:[#allocation8 + $0x68] sm:$0xff]
    %v183 = vld [vmem:[#allocation8 + $0x70] sm:$0xff]
    %v184 = vld [vmem:[#allocation8 + $0x78] sm:$0xff]
    %v185 = vpack.c.bf16 %v170, %v169
    %v186 = vpack.c.bf16 %v172, %v171
    %v187 = vpack.c.bf16 %v174, %v173
    %v188 = vpack.c.bf16 %v176, %v175
    %v189 = vpack.c.bf16 %v178, %v177
    %v190 = vpack.c.bf16 %v180, %v179
    %v191 = vpack.c.bf16 %v182, %v181
    %v192 = vpack.c.bf16 %v184, %v183
    %v193 = vld [vmem:[%s5] sm:$0x1]
    %v195 = vlaneseq
    %v196 = vshrl.u32 %v195, 7
    %v197 = vsub.s32 0, %v196
    %v198 = vrot.slane %v193, %v197
    %200 = vmatprep.subr.bf16.mxu0 0
    %201 = vmatpush1.bf16.msra.mxu0 %v185
    %202 = vmatprep.subr.bf16.mxu0 0
    %203 = vmatpush1.bf16.msra.mxu0 %v186
    %204 = vmatprep.subr.bf16.mxu0 0
    %205 = vmatpush1.bf16.msra.mxu0 %v187
    %206 = vmatprep.subr.bf16.mxu0 0
    %207 = vmatpush1.bf16.msra.mxu0 %v188
    %208 = vmatprep.subr.bf16.mxu0 0
    %209 = vmatpush1.bf16.msra.mxu0 %v189
    %210 = vmatprep.subr.bf16.mxu0 0
    %211 = vmatpush1.bf16.msra.mxu0 %v190
    %212 = vmatprep.subr.bf16.mxu0 0
    %213 = vmatpush1.bf16.msra.mxu0 %v191
    %214 = vmatprep.subr.bf16.mxu0 0
    %215 = vmatpush1.bf16.msra.mxu0 %v192
    %216 = vmatprep.subr.bf16.mxu0 0
    %217 = vmatpush1.bf16.msra.mxu0 0
    %218 = vmatprep.subr.bf16.mxu0 0
    %219 = vmatpush1.bf16.msra.mxu0 0
    %220 = vmatprep.subr.bf16.mxu0 0
    %221 = vmatpush1.bf16.msra.mxu0 0
    %222 = vmatprep.subr.bf16.mxu0 0
    %223 = vmatpush1.bf16.msra.mxu0 0
    %224 = vmatprep.subr.bf16.mxu0 0
    %225 = vmatpush1.bf16.msra.mxu0 0
    %226 = vmatprep.subr.bf16.mxu0 0
    %227 = vmatpush1.bf16.msra.mxu0 0
    %228 = vmatprep.subr.bf16.mxu0 0
    %229 = vmatpush1.bf16.msra.mxu0 0
    %230 = vmatprep.subr.bf16.mxu0 0
    %231 = vmatpush1.bf16.msra.mxu0 0
    %232 = vmatprep.mubr.bf16.mxu0 0
    %233 = vmatmul.mubr.bf16.gmra.mrb[0].mxu0 %v168
    %v234 = vpop.f32.mrb[0].mxu0
    %v235 = vadd.f32 %v198, %v234
    %v236 = vpop.f32.mrb[0].mxu0
    %v237 = vpop.f32.mrb[0].mxu0
    %v238 = vadd.f32 %v198, %v237
    %v239 = vpop.f32.mrb[0].mxu0
    %240 = vdwg.mxu0
    %v241 = vmax.f32 %v235, 0.0
    %v242 = vmax.f32 %v238, 0.0
    %v243 = vld [vmem:[%s6] sm:$0xff]
    %v244 = vld [vmem:[%s6 + $0x8] sm:$0xff]
    %vm245 = vcmp.lt.f32.partialorder %v243, 0.25
    %vm246 = vcmp.lt.f32.partialorder %v244, 0.25
    %v247 = vmul.f32 %v241, 4.0
    %v248 = vmul.f32 %v242, 4.0
    %v249 = vsel %vm245, %v247, 0.0
    %v250 = vsel %vm246, %v248, 0.0
    %251 = vst [vmem:[#allocation10] sm:$0xff] %v249
    %252 = vst [vmem:[#allocation10 + $0x8] sm:$0xff] %v250
    // Predicated region
    $region46: #{tpu_custom_call.1} parent=1 // pred_check
      _
    $region47: #{tpu_custom_call.1} parent=1 // pred_check_branch
      %254 = sbr.rel (0) target = $region49
    $region48: #{tpu_custom_call.1} parent=1 // pred_region
      %s256 = ssub.s32 256, 256
      %257 = vsyncadd [#allocation4], %s256
      %s258 = sshll.u32 [#allocation10], 4
      %s259 = int_to_ptr.vmem [resolvable:$true] %s258
      %264 = dma.vmem_to_hbm [thread:$0]  %s259, 256, %s7, [#allocation4], 128, 128, 8
    $region49: #{tpu_custom_call.1} parent=1 // pred_fallthru
      _
    // Predicated region
    $region50: #{tpu_custom_call.1} parent=1 // pred_check
      _
    $region51: #{tpu_custom_call.1} parent=1 // pred_check_branch
      %266 = sbr.rel (0) target = $region53
    $region52: #{tpu_custom_call.1} parent=1 // pred_region
      %267 = dma.done [#allocation4], 256
    $region53: #{tpu_custom_call.1} parent=1 // pred_fallthru
      _
    %268 = vsyncpa [#allocation3], 1
    %269 = vsyncpa [#allocation6], 1
    %270 = vsyncpa [#allocation9], 1
    %271 = vsyncpa [#allocation4], 1

</llo_original>
